<compile_context>
chip_gen: v7x
topology: tpu7x:2x2x1
jax: 0.10.0
libtpu: 0.0.40
codegen_flags: <defaults>
</compile_context>

<pallas_src>
import functools

import jax
import jax.numpy as jnp
from jax import lax
from jax.experimental import pallas as pl
from jax.experimental.pallas import tpu as pltpu


def _round_up(a, b):
    return ((a + b - 1) // b) * b


def _largest_divisor_tile(dim, max_tile, align):
    """Largest multiple-of-`align` divisor of `dim` that is <= max_tile."""
    best = align
    t = align
    cap = min(max_tile, dim)
    while t <= cap:
        if dim % t == 0:
            best = t
        t += align
    return best


def _vmem_capacity_bytes():
    try:
        cap = int(pltpu.get_tpu_info().vmem_capacity_bytes)
        if cap > 0:
            return cap
    except Exception:
        pass
    return 64 << 20  # conservative fallback (v7x per-core VMEM)


def _vmem_estimate(tm, tn, tk, out_itemsize, k_tiled):
    est = (2 * tm * tk * 2          # x tile, bf16, double-buffered
           + 2 * tn * tk * 2        # W tile, bf16, double-buffered
           + 2 * tn * 4 * 2         # bias tile (1, tn) f32, double-buffered
           + 2 * tm * tn * out_itemsize)  # output tile, double-buffered
    if k_tiled:
        est += tm * tn * 4          # f32 accumulator scratch
    return est


# contract x dim 1 with W dim 1: (tm, tk) x (tn, tk) -> (tm, tn)
_DN = (((1,), (1,)), ((), ()))


def _linear_kernel_single_k(x_ref, w_ref, b_ref, o_ref):
    """Whole K (hidden) in one tile: no accumulator scratch, no K grid axis."""
    acc = lax.dot_general(x_ref[...], w_ref[...], dimension_numbers=_DN,
                          preferred_element_type=jnp.float32)
    o_ref[...] = (acc + b_ref[...].astype(jnp.float32)).astype(o_ref.dtype)


def _linear_kernel_acc(x_ref, w_ref, b_ref, o_ref, acc_ref):
    """K-tiled path: accumulate over the (last, arbitrary) K grid axis."""
    k = pl.program_id(2)

    @pl.when(k == 0)
    def _init():
        acc_ref[...] = jnp.zeros_like(acc_ref)

    acc_ref[...] += lax.dot_general(x_ref[...], w_ref[...], dimension_numbers=_DN,
                                    preferred_element_type=jnp.float32)

    @pl.when(k == pl.num_programs(2) - 1)
    def _finalize():
        o_ref[...] = (acc_ref[...] + b_ref[...].astype(jnp.float32)).astype(o_ref.dtype)


@functools.partial(jax.jit, static_argnames=("tm", "tn", "tk", "logits_dtype"))
def output_embedding_forward(x, weight, bias, *, tm=None, tn=None, tk=None,
                             logits_dtype=None):
    """Pallas implementation of F.linear(x, weight, bias).

    x:      (..., H)
    weight: (V, H)   (PyTorch convention — NOT transposed in the wrapper)
    bias:   (V,)
    returns (..., V), dtype = logits_dtype or x.dtype.

    Matmul operands are streamed in bf16 with f32 accumulation (MXU-native).
    """
    orig_shape = x.shape
    H = orig_shape[-1]
    V, H_w = weight.shape
    assert H_w == H, (weight.shape, H)

    out_dtype = jnp.dtype(logits_dtype) if logits_dtype is not None else x.dtype
    ob = jnp.dtype(out_dtype).itemsize

    x2d = x.reshape(-1, H)
    M = x2d.shape[0]

    # ---- per-generation VMEM budget ----
    cap = _vmem_capacity_bytes()
    budget = (cap * 3) // 4          # ~48 MiB on v7x, ~96 MiB on v5e/v6e
    big_vmem = cap >= (96 << 20)

    tm_max = 1024 if big_vmem else 512
    tn_max = 1024
    full_h_thresh = 8192 if big_vmem else 4096

    M8 = _round_up(M, 8)
    H128 = _round_up(H, 128)
    V128 = _round_up(V, 128)

    # ---- tk: full hidden whenever it fits; otherwise a large divisor tile ----
    if tk is None:
        if H128 <= full_h_thresh:
            tk = H128                                  # single-K fast path
        else:
            tk = _largest_divisor_tile(H128, 4096, 128)
    H_p = _round_up(H128, tk)

    # ---- tn: largest 128-multiple dividing the 128-aligned vocab (no W pad
    #          for the common "vocab % 128 == 0" case) ----
    if tn is None:
        tn = _largest_divisor_tile(V128, tn_max, 128)
    V_p = _round_up(V128, tn)

    # ---- tm: big tiles so the (V, H) weight is re-read as few times as
    #          possible (grid_m = M_p / tm) ----
    if tm is None:
        if M8 <= tm_max:
            tm = M8
        else:
            tm = _largest_divisor_tile(M8, tm_max, 8)
            if tm < 256:             # padding x beats a tiny tm (more W passes)
                tm = tm_max
    M_p = _round_up(M8, tm)

    k_tiled = (H_p // tk) > 1

    # ---- shrink to fit the VMEM budget (rarely triggers with bf16 tiles) ----
    while _vmem_estimate(tm, tn, tk, ob, k_tiled) > budget and tn > 128:
        tn = _largest_divisor_tile(V_p, tn - 128, 128)
    while _vmem_estimate(tm, tn, tk, ob, k_tiled) > budget and tm > 128:
        tm = max(128, ((tm // 2) // 8) * 8)
        M_p = _round_up(M8, tm)

    grid_m, grid_n, grid_k = M_p // tm, V_p // tn, H_p // tk
    vmem_limit = int(budget)

    # ---- one-time bf16 conversion (halves HBM bytes for every re-read) and
    #      zero padding only where shapes require it ----
    xw = x2d if x2d.dtype == jnp.bfloat16 else x2d.astype(jnp.bfloat16)
    if (M_p, H_p) != (M, H):
        xw = jnp.pad(xw, ((0, M_p - M), (0, H_p - H)))

    w = weight if weight.dtype == jnp.bfloat16 else weight.astype(jnp.bfloat16)
    if (V_p, H_p) != (V, H):
        w = jnp.pad(w, ((0, V_p - V), (0, H_p - H)))

    b2d = bias.astype(jnp.float32).reshape(1, V)
    if V_p != V:
        b2d = jnp.pad(b2d, ((0, 0), (0, V_p - V)))

    out_shape = jax.ShapeDtypeStruct((M_p, V_p), out_dtype)

    if grid_k == 1:
        out = pl.pallas_call(
            _linear_kernel_single_k,
            out_shape=out_shape,
            grid_spec=pltpu.PrefetchScalarGridSpec(
                num_scalar_prefetch=0,
                grid=(grid_m, grid_n),
                in_specs=[
                    pl.BlockSpec((tm, tk), lambda i, j: (i, 0)),   # x tile
                    pl.BlockSpec((tn, tk), lambda i, j: (j, 0)),   # W tile (V, H)
                    pl.BlockSpec((1, tn), lambda i, j: (0, j)),    # bias tile
                ],
                out_specs=pl.BlockSpec((tm, tn), lambda i, j: (i, j)),
            ),
            compiler_params=pltpu.CompilerParams(
                dimension_semantics=("parallel", "parallel"),
                vmem_limit_bytes=vmem_limit,
            ),
        )(xw, w, b2d)
    else:
        out = pl.pallas_call(
            _linear_kernel_acc,
            out_shape=out_shape,
            grid_spec=pltpu.PrefetchScalarGridSpec(
                num_scalar_prefetch=0,
                grid=(grid_m, grid_n, grid_k),
                in_specs=[
                    pl.BlockSpec((tm, tk), lambda i, j, k: (i, k)),  # x tile
                    pl.BlockSpec((tn, tk), lambda i, j, k: (j, k)),  # W tile (V, H)
                    pl.BlockSpec((1, tn), lambda i, j, k: (0, j)),   # bias tile
                ],
                out_specs=pl.BlockSpec((tm, tn), lambda i, j, k: (i, j)),
                scratch_shapes=[pltpu.VMEM((tm, tn), jnp.float32)],
            ),
            compiler_params=pltpu.CompilerParams(
                dimension_semantics=("parallel", "parallel", "arbitrary"),
                vmem_limit_bytes=vmem_limit,
            ),
        )(xw, w, b2d)

    if (M_p, V_p) != (M, V):
        out = out[:M, :V]
    return out.reshape(*orig_shape[:-1], V)


def _reference_bf16(x, weight, bias):
    """Reference matching the kernel's numerics: bf16 operands, f32 acc."""
    H = x.shape[-1]
    V = weight.shape[0]
    y = lax.dot_general(
        x.reshape(-1, H).astype(jnp.bfloat16),
        weight.astype(jnp.bfloat16),
        dimension_numbers=_DN,
        preferred_element_type=jnp.float32,
    ) + bias.astype(jnp.float32)
    return y.reshape(*x.shape[:-1], V).astype(x.dtype)


def _reference_f32(x, weight, bias):
    return jnp.einsum("...h,vh->...v", x, weight) + bias


def _check(x, weight, bias, **tile_kw):
    y = output_embedding_forward(x, weight, bias, **tile_kw)
    jax.block_until_ready(y)
    assert y.shape == (*x.shape[:-1], weight.shape[0]), y.shape
    y_bf = _reference_bf16(x, weight, bias)
    assert jnp.allclose(y, y_bf, atol=1e-4, rtol=1e-4), float(jnp.max(jnp.abs(y - y_bf)))
    y_f32 = _reference_f32(x, weight, bias)
    assert jnp.allclose(y, y_f32, atol=2e-2, rtol=5e-2), float(jnp.max(jnp.abs(y - y_f32)))
    return y


if __name__ == "__main__":
    key = jax.random.PRNGKey(0)
    kx, kw, kb = jax.random.split(key, 3)

    # Test 1: nicely-shaped small case (single-K fast path, no padding at all).
    B, S, H, V = 2, 8, 128, 256
    x = jax.random.normal(kx, (B, S, H), dtype=jnp.float32)
    weight = jax.random.normal(kw, (V, H), dtype=jnp.float32) * 0.02
    bias = jax.random.normal(kb, (V,), dtype=jnp.float32) * 0.02
    _check(x, weight, bias)

    # Test 2: non-divisible shapes exercise the padding path.
    B2, S2, H2, V2 = 2, 7, 200, 300
    x2 = jax.random.normal(kx, (B2, S2, H2), dtype=jnp.float32)
    w2 = jax.random.normal(kw, (V2, H2), dtype=jnp.float32) * 0.02
    b2 = jax.random.normal(kb, (V2,), dtype=jnp.float32) * 0.02
    _check(x2, w2, b2)

    # Test 3: force a K-tiled grid (accumulator path).
    B3, S3, H3, V3 = 1, 8, 256, 256
    x3 = jax.random.normal(kx, (B3, S3, H3), dtype=jnp.float32)
    w3 = jax.random.normal(kw, (V3, H3), dtype=jnp.float32) * 0.02
    b3 = jax.random.normal(kb, (V3,), dtype=jnp.float32) * 0.02
    _check(x3, w3, b3, tk=128)

    # Test 4: bf16 inputs + bf16 logits path (no conversions inside the wrapper).
    x4 = x.astype(jnp.bfloat16)
    w4 = weight.astype(jnp.bfloat16)
    y4 = output_embedding_forward(x4, w4, bias, logits_dtype=jnp.bfloat16)
    jax.block_until_ready(y4)
    assert y4.shape == (B, S, V) and y4.dtype == jnp.bfloat16

    print("KERNEL_OK")
</pallas_src>

<mosaic_0001>
module attributes {stable_mosaic.version = 11 : i64} {
  func.func @_linear_kernel_single_k(%arg0: i32, %arg1: i32, %arg2: memref<16x128xbf16, #tpu.memory_space<vmem>>, %arg3: memref<256x128xbf16, #tpu.memory_space<vmem>>, %arg4: memref<1x256xf32, #tpu.memory_space<vmem>>, %arg5: memref<16x256xf32, #tpu.memory_space<vmem>>) attributes {dimension_semantics = [#tpu.dimension_semantics<parallel>, #tpu.dimension_semantics<parallel>], iteration_bounds = array<i64: 1, 1>, scalar_prefetch = 0 : i64, scratch_operands = 0 : i64, tpu.core_type = #tpu.core_type<tc>, window_params = [{transform_indices = @transform_0, window_bounds = array<i64: 16, 128>}, {transform_indices = @transform_1, window_bounds = array<i64: 256, 128>}, {transform_indices = @transform_2, window_bounds = array<i64: 1, 256>}, {transform_indices = @transform_3, window_bounds = array<i64: 16, 256>}]} {
    %c0 = arith.constant 0 : index
    %c0_0 = arith.constant 0 : index
    %0 = vector.load %arg2[%c0, %c0_0] : memref<16x128xbf16, #tpu.memory_space<vmem>>, vector<16x128xbf16>
    %c0_1 = arith.constant 0 : index
    %c0_2 = arith.constant 0 : index
    %1 = vector.load %arg3[%c0_1, %c0_2] : memref<256x128xbf16, #tpu.memory_space<vmem>>, vector<256x128xbf16>
    %cst = arith.constant dense<0.000000e+00> : vector<16x256xf32>
    %2 = tpu.matmul %0, %1, %cst {dimension_numbers = #tpu.dot_dimension_numbers<[1], [1], [0], [0], [0, 0, 1, 0], [], []>} : vector<16x128xbf16>, vector<256x128xbf16>, vector<16x256xf32> -> vector<16x256xf32>
    %c0_3 = arith.constant 0 : index
    %c0_4 = arith.constant 0 : index
    %3 = vector.load %arg4[%c0_3, %c0_4] : memref<1x256xf32, #tpu.memory_space<vmem>>, vector<1x256xf32>
    %4 = vector.broadcast %3 : vector<1x256xf32> to vector<16x256xf32>
    %5 = arith.addf %2, %4 : vector<16x256xf32>
    %c0_5 = arith.constant 0 : index
    %c0_6 = arith.constant 0 : index
    %6 = vector.load %arg5[%c0_5, %c0_6] : memref<16x256xf32, #tpu.memory_space<vmem>>, vector<16x256xf32>
    tpu.vector_store %arg5[%c0_5, %c0_6], %5 {strides = array<i32>} : memref<16x256xf32, #tpu.memory_space<vmem>>, vector<16x256xf32>,
    return
  }
  func.func @transform_0(%arg0: i32, %arg1: i32) -> (i32, i32) {
    %c0_i32 = arith.constant 0 : i32
    %c0_i32_0 = arith.constant 0 : i32
    return %arg0, %c0_i32 : i32, i32
  }
  func.func @transform_1(%arg0: i32, %arg1: i32) -> (i32, i32) {
    %c0_i32 = arith.constant 0 : i32
    %c0_i32_0 = arith.constant 0 : i32
    return %arg1, %c0_i32 : i32, i32
  }
  func.func @transform_2(%arg0: i32, %arg1: i32) -> (i32, i32) {
    %c0_i32 = arith.constant 0 : i32
    %c0_i32_0 = arith.constant 0 : i32
    return %c0_i32, %arg1 : i32, i32
  }
  func.func @transform_3(%arg0: i32, %arg1: i32) -> (i32, i32) {
    %c0_i32 = arith.constant 0 : i32
    return %arg0, %arg1 : i32, i32
  }
}

</mosaic_0001>

<llo_original>
// kernel: output_embedding_forward.1
$region0: #{output_embedding_forward.1}
  #allocation0 [shape = 'u32[]', space=smem, size = 0x4, offset = 0x4, fixed_abs, tag = 'smem constant byte address 0x4 - core index']
  #allocation1 [shape = 'u32[144,128]{1,0:T(1,128)}', space=vmem, size = 0x12000, scoped, tag = 'internal scratch']
  %s0 = inlined_call_operand.vmem [shape: bf16[16,128], index: 0, kind: input, shape index: {}]
  %s1 = inlined_call_operand.vmem [shape: bf16[256,128], index: 1, kind: input, shape index: {}]
  %s2 = inlined_call_operand.vmem [shape: f32[1,256], index: 2, kind: input, shape index: {}]
  %s3 = inlined_call_operand.hbm [shape: f32[16,256], index: 3, kind: output, shape index: {}]
  %s4 = sld [smem:[#allocation0]]
  $region22: #{output_embedding_forward.1} parent=0
    _
  %s6 = ssub.s32 1, %s4
  %s7 = scalar_select 0, %s6, %s4
  $region1: #{output_embedding_forward.1} parent=0
    #allocation2 [shape = 'u8[16384]{0}', space=vmem, size = 0x4000, scoped, tag = 'output window, operand 0, single buffered']
    #allocation3 [shape = 's32[1]{0}', space=sflag, size = 0x4, scoped, tag = 'scoped memory for output_embedding_forward.1']
    %8 = vsyncpa [#allocation3], 0
    // Predicated region
    $region2: #{output_embedding_forward.1} parent=1 // pred_check
      _
    $region3: #{output_embedding_forward.1} parent=1 // pred_check_branch
      %10 = sbr.rel (0) target = $region5
    $region4: #{output_embedding_forward.1} parent=1 // pred_region
      _
    $region5: #{output_embedding_forward.1} parent=1 // pred_fallthru
      _
    // Predicated region
    $region6: #{output_embedding_forward.1} parent=1 // pred_check
      _
    $region7: #{output_embedding_forward.1} parent=1 // pred_check_branch
      %12 = sbr.rel (0) target = $region9
    $region8: #{output_embedding_forward.1} parent=1 // pred_region
      _
    $region9: #{output_embedding_forward.1} parent=1 // pred_fallthru
      _
    // Predicated region
    $region10: #{output_embedding_forward.1} parent=1 // pred_check
      _
    $region11: #{output_embedding_forward.1} parent=1 // pred_check_branch
      %14 = sbr.rel (0) target = $region13
    $region12: #{output_embedding_forward.1} parent=1 // pred_region
      _
    $region13: #{output_embedding_forward.1} parent=1 // pred_fallthru
      _
    %v16 = vld [vmem:[%s0] sm:$0xf]
    %v17 = vld [vmem:[%s0 + $0x4] sm:$0xf]
    %v18 = vld [vmem:[%s1] sm:$0xf]
    %v19 = vld [vmem:[%s1 + $0x4] sm:$0xf]
    %v20 = vld [vmem:[%s1 + $0x8] sm:$0xf]
    %v21 = vld [vmem:[%s1 + $0xc] sm:$0xf]
    %v22 = vld [vmem:[%s1 + $0x10] sm:$0xf]
    %v23 = vld [vmem:[%s1 + $0x14] sm:$0xf]
    %v24 = vld [vmem:[%s1 + $0x18] sm:$0xf]
    %v25 = vld [vmem:[%s1 + $0x1c] sm:$0xf]
    %v26 = vld [vmem:[%s1 + $0x20] sm:$0xf]
    %v27 = vld [vmem:[%s1 + $0x24] sm:$0xf]
    %v28 = vld [vmem:[%s1 + $0x28] sm:$0xf]
    %v29 = vld [vmem:[%s1 + $0x2c] sm:$0xf]
    %v30 = vld [vmem:[%s1 + $0x30] sm:$0xf]
    %v31 = vld [vmem:[%s1 + $0x34] sm:$0xf]
    %v32 = vld [vmem:[%s1 + $0x38] sm:$0xf]
    %v33 = vld [vmem:[%s1 + $0x3c] sm:$0xf]
    %v34 = vld [vmem:[%s1 + $0x40] sm:$0xf]
    %v35 = vld [vmem:[%s1 + $0x44] sm:$0xf]
    %v36 = vld [vmem:[%s1 + $0x48] sm:$0xf]
    %v37 = vld [vmem:[%s1 + $0x4c] sm:$0xf]
    %v38 = vld [vmem:[%s1 + $0x50] sm:$0xf]
    %v39 = vld [vmem:[%s1 + $0x54] sm:$0xf]
    %v40 = vld [vmem:[%s1 + $0x58] sm:$0xf]
    %v41 = vld [vmem:[%s1 + $0x5c] sm:$0xf]
    %v42 = vld [vmem:[%s1 + $0x60] sm:$0xf]
    %v43 = vld [vmem:[%s1 + $0x64] sm:$0xf]
    %v44 = vld [vmem:[%s1 + $0x68] sm:$0xf]
    %v45 = vld [vmem:[%s1 + $0x6c] sm:$0xf]
    %v46 = vld [vmem:[%s1 + $0x70] sm:$0xf]
    %v47 = vld [vmem:[%s1 + $0x74] sm:$0xf]
    %v48 = vld [vmem:[%s1 + $0x78] sm:$0xf]
    %v49 = vld [vmem:[%s1 + $0x7c] sm:$0xf]
    %v50 = vld [vmem:[%s2] sm:$0x3]
    %v52 = vlaneseq
    %v53 = vshrl.u32 %v52, 7
    %v54 = vsub.s32 0, %v53
    %v55 = vrot.slane %v50, %v54
    %v56 = vlaneseq
    %v57 = vshrl.u32 %v56, 7
    %v58 = vsub.s32 1, %v57
    %v59 = vrot.slane %v50, %v58
    %v64 = vunpack.c.l.b16 %v16
    %v65 = vunpack.c.l.b16 %v17
    %v66 = vpack.c.b16 %v65, %v64
    %v100 = vunpack.c.l.b16 %v18
    %v101 = vunpack.c.l.b16 %v19
    %v102 = vunpack.c.l.b16 %v20
    %v103 = vunpack.c.l.b16 %v21
    %v104 = vunpack.c.l.b16 %v22
    %v105 = vunpack.c.l.b16 %v23
    %v106 = vunpack.c.l.b16 %v24
    %v107 = vunpack.c.l.b16 %v25
    %v108 = vunpack.c.l.b16 %v26
    %v109 = vunpack.c.l.b16 %v27
    %v110 = vunpack.c.l.b16 %v28
    %v111 = vunpack.c.l.b16 %v29
    %v112 = vunpack.c.l.b16 %v30
    %v113 = vunpack.c.l.b16 %v31
    %v114 = vunpack.c.l.b16 %v32
    %v115 = vunpack.c.l.b16 %v33
    %v116 = vunpack.c.l.b16 %v34
    %v117 = vunpack.c.l.b16 %v35
    %v118 = vunpack.c.l.b16 %v36
    %v119 = vunpack.c.l.b16 %v37
    %v120 = vunpack.c.l.b16 %v38
    %v121 = vunpack.c.l.b16 %v39
    %v122 = vunpack.c.l.b16 %v40
    %v123 = vunpack.c.l.b16 %v41
    %v124 = vunpack.c.l.b16 %v42
    %v125 = vunpack.c.l.b16 %v43
    %v126 = vunpack.c.l.b16 %v44
    %v127 = vunpack.c.l.b16 %v45
    %v128 = vunpack.c.l.b16 %v46
    %v129 = vunpack.c.l.b16 %v47
    %v130 = vunpack.c.l.b16 %v48
    %v131 = vunpack.c.l.b16 %v49
    %v132 = vpack.c.b16 %v101, %v100
    %v133 = vpack.c.b16 %v103, %v102
    %v134 = vpack.c.b16 %v105, %v104
    %v135 = vpack.c.b16 %v107, %v106
    %v136 = vpack.c.b16 %v109, %v108
    %v137 = vpack.c.b16 %v111, %v110
    %v138 = vpack.c.b16 %v113, %v112
    %v139 = vpack.c.b16 %v115, %v114
    %v140 = vpack.c.b16 %v117, %v116
    %v141 = vpack.c.b16 %v119, %v118
    %v142 = vpack.c.b16 %v121, %v120
    %v143 = vpack.c.b16 %v123, %v122
    %v144 = vpack.c.b16 %v125, %v124
    %v145 = vpack.c.b16 %v127, %v126
    %v146 = vpack.c.b16 %v129, %v128
    %v147 = vpack.c.b16 %v131, %v130
    %164 = vmatprep.subr.bf16.mxu0 0
    %165 = vmatpush1.bf16.xpose.msra.mxu0 %v132
    %166 = vmatprep.subr.bf16.mxu0 0
    %167 = vmatpush1.bf16.xpose.msra.mxu0 %v133
    %168 = vmatprep.subr.bf16.mxu0 0
    %169 = vmatpush1.bf16.xpose.msra.mxu0 %v134
    %170 = vmatprep.subr.bf16.mxu0 0
    %171 = vmatpush1.bf16.xpose.msra.mxu0 %v135
    %172 = vmatprep.subr.bf16.mxu0 0
    %173 = vmatpush1.bf16.xpose.msra.mxu0 %v136
    %174 = vmatprep.subr.bf16.mxu0 0
    %175 = vmatpush1.bf16.xpose.msra.mxu0 %v137
    %176 = vmatprep.subr.bf16.mxu0 0
    %177 = vmatpush1.bf16.xpose.msra.mxu0 %v138
    %178 = vmatprep.subr.bf16.mxu0 0
    %179 = vmatpush1.bf16.xpose.msra.mxu0 %v139
    %180 = vmatprep.subr.bf16.mxu0 0
    %181 = vmatpush1.bf16.xpose.msra.mxu0 %v140
    %182 = vmatprep.subr.bf16.mxu0 0
    %183 = vmatpush1.bf16.xpose.msra.mxu0 %v141
    %184 = vmatprep.subr.bf16.mxu0 0
    %185 = vmatpush1.bf16.xpose.msra.mxu0 %v142
    %186 = vmatprep.subr.bf16.mxu0 0
    %187 = vmatpush1.bf16.xpose.msra.mxu0 %v143
    %188 = vmatprep.subr.bf16.mxu0 0
    %189 = vmatpush1.bf16.xpose.msra.mxu0 %v144
    %190 = vmatprep.subr.bf16.mxu0 0
    %191 = vmatpush1.bf16.xpose.msra.mxu0 %v145
    %192 = vmatprep.subr.bf16.mxu0 0
    %193 = vmatpush1.bf16.xpose.msra.mxu0 %v146
    %194 = vmatprep.subr.bf16.mxu0 0
    %195 = vmatpush1.bf16.xpose.msra.mxu0 %v147
    %196 = vmatprep.mubr.bf16.mxu0 0
    %197 = vmatmul.mubr.bf16.gmra.mrb[0].mxu0 %v66
    %v198 = vpop.f32.mrb[0].mxu0
    %v199 = vadd.f32 %v55, %v198
    %v200 = vpop.f32.mrb[0].mxu0
    %v201 = vadd.f32 %v59, %v200
    %v202 = vpop.f32.mrb[0].mxu0
    %v203 = vadd.f32 %v55, %v202
    %v204 = vpop.f32.mrb[0].mxu0
    %v205 = vadd.f32 %v59, %v204
    %206 = vdwg.mxu0
    %207 = vst [vmem:[#allocation2] sm:$0xff] %v199
    %208 = vst [vmem:[#allocation2 + $0x8] sm:$0xff] %v201
    %209 = vst [vmem:[#allocation2 + $0x10] sm:$0xff] %v203
    %210 = vst [vmem:[#allocation2 + $0x18] sm:$0xff] %v205
    // Predicated region
    $region14: #{output_embedding_forward.1} parent=1 // pred_check
      _
    $region15: #{output_embedding_forward.1} parent=1 // pred_check_branch
      %212 = sbr.rel (0) target = $region17
    $region16: #{output_embedding_forward.1} parent=1 // pred_region
      %s214 = ssub.s32 512, 512
      %215 = vsyncadd [#allocation3], %s214
      %s216 = sshll.u32 [#allocation2], 4
      %s217 = int_to_ptr.vmem [resolvable:$true] %s216
      %222 = dma.vmem_to_hbm [thread:$0]  %s217, 512, %s3, [#allocation3], 256, 256, 16
    $region17: #{output_embedding_forward.1} parent=1 // pred_fallthru
      _
    // Predicated region
    $region18: #{output_embedding_forward.1} parent=1 // pred_check
      _
    $region19: #{output_embedding_forward.1} parent=1 // pred_check_branch
      %224 = sbr.rel (0) target = $region21
    $region20: #{output_embedding_forward.1} parent=1 // pred_region
      %225 = dma.done [#allocation3], 512
    $region21: #{output_embedding_forward.1} parent=1 // pred_fallthru
      _
    %226 = vsyncpa [#allocation3], 1

</llo_original>
